<compile_context>
chip_gen: v7x
topology: tpu7x:2x2x1
jax: 0.10.0
libtpu: 0.0.40
codegen_flags: <defaults>
</compile_context>

<pallas_src>
import functools

import jax
import jax.numpy as jnp
from jax.experimental import pallas as pl
from jax.experimental.pallas import tpu as pltpu


def bigram_kernel(ids_ref, table_ref, lse_ref, logits_ref, nll_ref):
    # ids_ref: (TM, 2) int32  (col 0 = idx, col 1 = target)
    # table_ref: (V, V) f32 ;  lse_ref: (1, V) f32 (logsumexp of each table row)
    tm = ids_ref.shape[0]
    v = table_ref.shape[0]

    ids = ids_ref[...]                                        # (TM, 2) int32
    idx = ids[:, 0:1]                                         # (TM, 1)
    tgt = ids[:, 1:2]                                         # (TM, 1)

    col = jax.lax.broadcasted_iota(jnp.int32, (tm, v), 1)     # (TM, V)

    # Embedding lookup as one-hot @ table (MXU); exact gather of table rows.
    is_idx = col == idx                                       # (TM, V) bool
    one_hot_idx = is_idx.astype(jnp.float32)
    logits = jnp.dot(one_hot_idx, table_ref[...],
                     preferred_element_type=jnp.float32)      # (TM, V)
    logits_ref[...] = logits

    # Per-row NLL without any in-kernel logsumexp: gather the precomputed
    # per-vocab lse with the same one-hot mask, gather the target logit, and
    # fold both gathers into a single cross-lane reduction.
    contrib = (jnp.where(is_idx, lse_ref[...], 0.0)
               - jnp.where(col == tgt, logits, 0.0))          # (TM, V)
    nll_ref[...] = jnp.sum(contrib, axis=-1, keepdims=True)   # (TM, 1)


def _cdiv(a, b):
    return (a + b - 1) // b


def _round_up(x, m):
    return ((x + m - 1) // m) * m


@functools.partial(jax.jit, static_argnames=("tm",))
def bigram_forward(idx, targets, table, tm=4096):
    """idx, targets: (B, T) int ids; table: (V, V) f32 -> (logits (B,T,V), loss)."""
    B, T = idx.shape
    V = table.shape[0]
    N = B * T
    table = table.astype(jnp.float32)

    # Balanced tiling: TM ~ N / ceil(N / tm), rounded to a sublane multiple.
    # Always aim for >= 2 tiles so both v7x TensorCores get work (harmless on
    # single-TC v5e/v6e), and keep tail padding below one tile.
    n_tiles = max(2, _cdiv(N, tm))
    TM = _round_up(_cdiv(N, n_tiles), 8)
    N_pad = _round_up(N, TM)
    num_tiles = N_pad // TM

    # Fold idx / targets into one (N, 2) int32 array (single DMA stream, one
    # lane-padded VMEM buffer).
    ids = jnp.stack(
        [idx.reshape(N).astype(jnp.int32), targets.reshape(N).astype(jnp.int32)],
        axis=-1,
    )                                                          # (N, 2)
    if N_pad != N:
        ids = jnp.pad(ids, ((0, N_pad - N), (0, 0)))  # padded rows -> token 0, sliced off

    # Hoisted log-softmax denominator: logits_row == table[idx], so
    # logsumexp(logits_row) == logsumexp(table[idx]); precompute per vocab entry.
    lse_vocab = jax.nn.logsumexp(table, axis=-1).reshape(1, V)  # (1, V) f32

    logits_pad, nll_pad = pl.pallas_call(
        bigram_kernel,
        grid=(num_tiles,),
        out_shape=(
            jax.ShapeDtypeStruct((N_pad, V), jnp.float32),
            jax.ShapeDtypeStruct((N_pad, 1), jnp.float32),
        ),
        in_specs=[
            pl.BlockSpec((TM, 2), lambda i: (i, 0)),
            pl.BlockSpec((V, V), lambda i: (0, 0)),    # table stays resident
            pl.BlockSpec((1, V), lambda i: (0, 0)),    # lse stays resident
        ],
        out_specs=(
            pl.BlockSpec((TM, V), lambda i: (i, 0)),
            pl.BlockSpec((TM, 1), lambda i: (i, 0)),
        ),
        compiler_params=pltpu.CompilerParams(
            dimension_semantics=("parallel",),
            vmem_limit_bytes=32 * 1024 * 1024,
        ),
    )(ids, table, lse_vocab)

    logits = logits_pad[:N].reshape(B, T, V)
    loss = jnp.sum(nll_pad[:N, 0]) / jnp.float32(N)   # mean over global N
    return logits, loss


def _reference(idx, targets, table):
    B, T = idx.shape
    V = table.shape[0]
    ref_logits = table[idx]                                   # (B, T, V)
    flat = ref_logits.reshape(B * T, V)
    lse = jax.nn.logsumexp(flat, axis=-1)
    tgt_logit = jnp.take_along_axis(flat, targets.reshape(B * T, 1), axis=-1)[:, 0]
    return ref_logits, jnp.mean(lse - tgt_logit)


if __name__ == "__main__":
    key = jax.random.PRNGKey(0)
    k_tab, k_idx, k_tgt, k_idx2, k_tgt2 = jax.random.split(key, 5)

    vocab_size = 65   # e.g. tiny-shakespeare charset size

    # nn.Embedding init ~ N(0, 1)
    table = jax.random.normal(k_tab, (vocab_size, vocab_size), dtype=jnp.float32)

    # Small case: B=2, T=8 (N=16 -> 2 tiles of 8 rows).
    B, T = 2, 8
    idx = jax.random.randint(k_idx, (B, T), 0, vocab_size, dtype=jnp.int32)
    targets = jax.random.randint(k_tgt, (B, T), 0, vocab_size, dtype=jnp.int32)

    logits, loss = bigram_forward(idx, targets, table)
    jax.block_until_ready((logits, loss))
    ref_logits, ref_loss = _reference(idx, targets, table)
    assert jnp.allclose(logits, ref_logits, atol=1e-5), "logits mismatch (small)"
    assert jnp.allclose(loss, ref_loss, atol=1e-5), "loss mismatch (small)"

    # Larger case exercising the multi-tile grid (N = 1024 -> 2 tiles of 512).
    B2, T2 = 4, 256
    idx2 = jax.random.randint(k_idx2, (B2, T2), 0, vocab_size, dtype=jnp.int32)
    targets2 = jax.random.randint(k_tgt2, (B2, T2), 0, vocab_size, dtype=jnp.int32)

    logits2, loss2 = bigram_forward(idx2, targets2, table)
    jax.block_until_ready((logits2, loss2))
    ref_logits2, ref_loss2 = _reference(idx2, targets2, table)
    assert jnp.allclose(logits2, ref_logits2, atol=1e-5), "logits mismatch (tiled)"
    assert jnp.allclose(loss2, ref_loss2, atol=1e-5), "loss mismatch (tiled)"

    # TODO(synk): generate() (autoregressive torch.multinomial sampling loop) is a
    # host-side loop around this forward pass and is not implemented as a kernel.
    print("KERNEL_OK")
</pallas_src>

<mosaic_0001>
module attributes {stable_mosaic.version = 11 : i64} {
  func.func @bigram_kernel(%arg0: i32, %arg1: memref<8x2xi32, #tpu.memory_space<vmem>>, %arg2: memref<65x65xf32, #tpu.memory_space<vmem>>, %arg3: memref<1x65xf32, #tpu.memory_space<vmem>>, %arg4: memref<8x65xf32, #tpu.memory_space<vmem>>, %arg5: memref<8x1xf32, #tpu.memory_space<vmem>>) attributes {dimension_semantics = [#tpu.dimension_semantics<parallel>], iteration_bounds = array<i64: 2>, scalar_prefetch = 0 : i64, scratch_operands = 0 : i64, tpu.core_type = #tpu.core_type<tc>, window_params = [{transform_indices = @transform_0, window_bounds = array<i64: 8, 2>}, {pipeline_mode = #tpu.pipeline_mode<synchronous>, transform_indices = @transform_1, window_bounds = array<i64: 65, 65>}, {pipeline_mode = #tpu.pipeline_mode<synchronous>, transform_indices = @transform_2, window_bounds = array<i64: 1, 65>}, {transform_indices = @transform_3, window_bounds = array<i64: 8, 65>}, {transform_indices = @transform_4, window_bounds = array<i64: 8, 1>}]} {
    %c0 = arith.constant 0 : index
    %c0_0 = arith.constant 0 : index
    %0 = vector.load %arg1[%c0, %c0_0] : memref<8x2xi32, #tpu.memory_space<vmem>>, vector<8x2xi32>
    %1 = vector.extract_strided_slice %0 {offsets = [0, 0], sizes = [8, 1], strides = [1, 1]} : vector<8x2xi32> to vector<8x1xi32>
    %2 = vector.extract_strided_slice %0 {offsets = [0, 1], sizes = [8, 1], strides = [1, 1]} : vector<8x2xi32> to vector<8x1xi32>
    %3 = tpu.iota {dimensions = array<i32: 1>} : vector<8x65xi32>
    %4 = vector.broadcast %1 : vector<8x1xi32> to vector<8x65xi32>
    %5 = arith.cmpi eq, %3, %4 : vector<8x65xi32>
    %6 = arith.extui %5 : vector<8x65xi1> to vector<8x65xi32>
    %7 = arith.sitofp %6 : vector<8x65xi32> to vector<8x65xf32>
    %c0_1 = arith.constant 0 : index
    %c0_2 = arith.constant 0 : index
    %8 = vector.load %arg2[%c0_1, %c0_2] : memref<65x65xf32, #tpu.memory_space<vmem>>, vector<65x65xf32>
    %cst = arith.constant dense<0.000000e+00> : vector<8x65xf32>
    %9 = tpu.matmul %7, %8, %cst {dimension_numbers = #tpu.dot_dimension_numbers<[1], [0], [0], [1], [0, 0, 1, 1], [], []>} : vector<8x65xf32>, vector<65x65xf32>, vector<8x65xf32> -> vector<8x65xf32>
    %c0_3 = arith.constant 0 : index
    %c0_4 = arith.constant 0 : index
    %10 = vector.load %arg4[%c0_3, %c0_4] : memref<8x65xf32, #tpu.memory_space<vmem>>, vector<8x65xf32>
    tpu.vector_store %arg4[%c0_3, %c0_4], %9 {strides = array<i32>} : memref<8x65xf32, #tpu.memory_space<vmem>>, vector<8x65xf32>,
    %c0_5 = arith.constant 0 : index
    %c0_6 = arith.constant 0 : index
    %11 = vector.load %arg3[%c0_5, %c0_6] : memref<1x65xf32, #tpu.memory_space<vmem>>, vector<1x65xf32>
    %cst_7 = arith.constant 0.000000e+00 : f32
    %12 = vector.shape_cast %11 : vector<1x65xf32> to vector<1x65xf32>
    %13 = vector.broadcast %12 : vector<1x65xf32> to vector<8x65xf32>
    %14 = vector.broadcast %cst_7 : f32 to vector<8x65xf32>
    %15 = arith.select %5, %13, %14 : vector<8x65xi1>, vector<8x65xf32>
    %16 = vector.broadcast %2 : vector<8x1xi32> to vector<8x65xi32>
    %17 = arith.cmpi eq, %3, %16 : vector<8x65xi32>
    %cst_8 = arith.constant 0.000000e+00 : f32
    %18 = vector.broadcast %cst_8 : f32 to vector<8x65xf32>
    %19 = arith.select %17, %9, %18 : vector<8x65xi1>, vector<8x65xf32>
    %20 = arith.subf %15, %19 : vector<8x65xf32>
    %cst_9 = arith.constant dense<0.000000e+00> : vector<8xf32>
    %21 = vector.multi_reduction <add>, %20, %cst_9 [1] : vector<8x65xf32> to vector<8xf32>
    %22 = vector.shape_cast %21 : vector<8xf32> to vector<8x1xf32>
    %c0_10 = arith.constant 0 : index
    %c0_11 = arith.constant 0 : index
    %23 = vector.load %arg5[%c0_10, %c0_11] : memref<8x1xf32, #tpu.memory_space<vmem>>, vector<8x1xf32>
    tpu.vector_store %arg5[%c0_10, %c0_11], %22 {strides = array<i32>} : memref<8x1xf32, #tpu.memory_space<vmem>>, vector<8x1xf32>,
    return
  }
  func.func @transform_0(%arg0: i32) -> (i32, i32) {
    %c0_i32 = arith.constant 0 : i32
    %c0_i32_0 = arith.constant 0 : i32
    return %arg0, %c0_i32 : i32, i32
  }
  func.func @transform_1(%arg0: i32) -> (i32, i32) {
    %c0_i32 = arith.constant 0 : i32
    %c0_i32_0 = arith.constant 0 : i32
    %c0_i32_1 = arith.constant 0 : i32
    return %c0_i32, %c0_i32_0 : i32, i32
  }
  func.func @transform_2(%arg0: i32) -> (i32, i32) {
    %c0_i32 = arith.constant 0 : i32
    %c0_i32_0 = arith.constant 0 : i32
    %c0_i32_1 = arith.constant 0 : i32
    return %c0_i32, %c0_i32_0 : i32, i32
  }
  func.func @transform_3(%arg0: i32) -> (i32, i32) {
    %c0_i32 = arith.constant 0 : i32
    %c0_i32_0 = arith.constant 0 : i32
    return %arg0, %c0_i32 : i32, i32
  }
  func.func @transform_4(%arg0: i32) -> (i32, i32) {
    %c0_i32 = arith.constant 0 : i32
    %c0_i32_0 = arith.constant 0 : i32
    return %arg0, %c0_i32 : i32, i32
  }
}

</mosaic_0001>

<llo_original>
// kernel: bigram_forward.1
$region0: #{bigram_forward.1}
  #allocation0 [shape = 'u32[]', space=smem, size = 0x4, offset = 0x4, fixed_abs, tag = 'smem constant byte address 0x4 - core index']
  #allocation1 [shape = 'u32[144,128]{1,0:T(1,128)}', space=vmem, size = 0x12000, scoped, tag = 'internal scratch']
  %s0 = inlined_call_operand.vmem [shape: s32[16,2], index: 0, kind: input, shape index: {}]
  %s1 = inlined_call_operand.vmem [shape: f32[65,65], index: 1, kind: input, shape index: {}]
  %s2 = inlined_call_operand.vmem [shape: f32[1,65], index: 2, kind: input, shape index: {}]
  %s3 = inlined_call_operand.hbm [shape: f32[16,65], index: 3, kind: output, shape index: {0}]
  %s4 = inlined_call_operand.vmem [shape: f32[16,1], index: 4, kind: output, shape index: {1}]
  %5 = xla_tuple %s3, %s4
  %s6 = sld [smem:[#allocation0]]
  $region53: #{bigram_forward.1} parent=0
    _
  %s8 = ssub.s32 1, %s6
  %s9 = scalar_select 0, %s8, %s6
  $region1: #{bigram_forward.1} parent=0
    #allocation2 [shape = 'u8[8192]{0}', space=vmem, size = 0x2000, scoped, tag = 'output window, operand 0']
    #allocation3 [shape = 's32[2]{0}', space=sflag, size = 0x8, scoped, tag = 'scoped memory for bigram_forward.1']
    %10 = vsyncpa [#allocation3], 0
    %s11 = scalar_lea.sflag [#allocation3], 1
    %12 = vsyncpa %s11, 0
    loop: start=0, step=1, limit=4
    $region2: #{bigram_forward.1} parent=1 // loop_pre_header
      _
    $region3: #{bigram_forward.1} parent=1 // loop_header
      %s14 = sphi 0, %s18
      %p15 = scmp.ge.s32.totalorder %s14, 4
      %s24 = sphi 0, %s26
      %s27 = sphi 0, %s24
      %s28 = sphi 0, %s27
      %s44 = sphi 0, %s28
      %s48 = sphi 0, %s48
      %s50 = sphi 0, %s48
      %s51 = sphi 0, %s50
      %s65 = sphi 0, %s51
      %s69 = sphi 0, %s69
      %s71 = sphi 0, %s69
      %s72 = sphi 0, %s71
      %s86 = sphi 0, %s72
      %s92 = sphi 0, %s94
      %s95 = sphi 0, %s92
      %s96 = sphi 0, %s95
      %s112 = sphi 0, %s96
      %s118 = sphi 0, %s120
      %s121 = sphi 0, %s118
      %s122 = sphi 0, %s121
      %s138 = sphi 0, %s122
    $region4: #{bigram_forward.1} parent=1 // loop_header_branch
      %17 = sbr.rel (%p15) target = $region8
    $region5: #{bigram_forward.1} parent=1 // loop_body
      %s19 = ssub.s32 %s14, 1
      %s20 = ssub.s32 %s14, 2
      %s21 = sadd.s32 %s14, 1
      %s22 = ssub.s32 %s14, %s21
      %p23 = scmp.eq.s32.totalorder %s22, 0
      %s25 = sadd.s32 %s24, 1
      %s26 = scalar_select %p23, %s24, %s25
      %p29 = pneg %p23
      %p30 = scmp.eq.s32.totalorder %s14, 1
      %p31 = por %p29, %p30
      %p32 = scmp.ne.s32.totalorder %s24, %s27
      %p33 = scmp.eq.s32.totalorder %s14, 0
      %p34 = por %p32, %p33
      %p35 = scmp.ne.s32.totalorder %s24, %s27
      %p36 = scmp.eq.s32.totalorder %s19, 1
      %p37 = por %p35, %p36
      %p38 = scmp.ne.s32.totalorder %s27, %s28
      %p39 = scmp.eq.s32.totalorder %s19, 0
      %p40 = por %p38, %p39
      %p41 = scmp.ne.s32.totalorder %s27, %s28
      %p42 = scmp.eq.s32.totalorder %s20, 1
      %p43 = por %p41, %p42
      %p45 = scmp.ne.s32.totalorder %s28, %s44
      %p46 = scmp.eq.s32.totalorder %s20, 0
      %p47 = por %p45, %p46
      %s49 = sadd.s32 %s48, 1
      %p52 = scmp.eq.s32.totalorder %s14, 1
      %p53 = scmp.ne.s32.totalorder %s48, %s50
      %p54 = scmp.eq.s32.totalorder %s14, 0
      %p55 = por %p53, %p54
      %p56 = scmp.ne.s32.totalorder %s48, %s50
      %p57 = scmp.eq.s32.totalorder %s19, 1
      %p58 = por %p56, %p57
      %p59 = scmp.ne.s32.totalorder %s50, %s51
      %p60 = scmp.eq.s32.totalorder %s19, 0
      %p61 = por %p59, %p60
      %p62 = scmp.ne.s32.totalorder %s50, %s51
      %p63 = scmp.eq.s32.totalorder %s20, 1
      %p64 = por %p62, %p63
      %p66 = scmp.ne.s32.totalorder %s51, %s65
      %p67 = scmp.eq.s32.totalorder %s20, 0
      %p68 = por %p66, %p67
      %s70 = sadd.s32 %s69, 1
      %p73 = scmp.eq.s32.totalorder %s14, 1
      %p74 = scmp.ne.s32.totalorder %s69, %s71
      %p75 = scmp.eq.s32.totalorder %s14, 0
      %p76 = por %p74, %p75
      %p77 = scmp.ne.s32.totalorder %s69, %s71
      %p78 = scmp.eq.s32.totalorder %s19, 1
      %p79 = por %p77, %p78
      %p80 = scmp.ne.s32.totalorder %s71, %s72
      %p81 = scmp.eq.s32.totalorder %s19, 0
      %p82 = por %p80, %p81
      %p83 = scmp.ne.s32.totalorder %s71, %s72
      %p84 = scmp.eq.s32.totalorder %s20, 1
      %p85 = por %p83, %p84
      %p87 = scmp.ne.s32.totalorder %s72, %s86
      %p88 = scmp.eq.s32.totalorder %s20, 0
      %p89 = por %p87, %p88
      %s90 = ssub.s32 %s14, %s21
      %p91 = scmp.eq.s32.totalorder %s90, 0
      %s93 = sadd.s32 %s92, 1
      %s94 = scalar_select %p91, %s92, %s93
      %p97 = pneg %p91
      %p98 = scmp.eq.s32.totalorder %s14, 1
      %p99 = por %p97, %p98
      %p100 = scmp.ne.s32.totalorder %s92, %s95
      %p101 = scmp.eq.s32.totalorder %s14, 0
      %p102 = por %p100, %p101
      %p103 = scmp.ne.s32.totalorder %s92, %s95
      %p104 = scmp.eq.s32.totalorder %s19, 1
      %p105 = por %p103, %p104
      %p106 = scmp.ne.s32.totalorder %s95, %s96
      %p107 = scmp.eq.s32.totalorder %s19, 0
      %p108 = por %p106, %p107
      %p109 = scmp.ne.s32.totalorder %s95, %s96
      %p110 = scmp.eq.s32.totalorder %s20, 1
      %p111 = por %p109, %p110
      %p113 = scmp.ne.s32.totalorder %s96, %s112
      %p114 = scmp.eq.s32.totalorder %s20, 0
      %p115 = por %p113, %p114
      %s116 = ssub.s32 %s14, %s21
      %p117 = scmp.eq.s32.totalorder %s116, 0
      %s119 = sadd.s32 %s118, 1
      %s120 = scalar_select %p117, %s118, %s119
      %p123 = pneg %p117
      %p124 = scmp.eq.s32.totalorder %s14, 1
      %p125 = por %p123, %p124
      %p126 = scmp.ne.s32.totalorder %s118, %s121
      %p127 = scmp.eq.s32.totalorder %s14, 0
      %p128 = por %p126, %p127
      %p129 = scmp.ne.s32.totalorder %s118, %s121
      %p130 = scmp.eq.s32.totalorder %s19, 1
      %p131 = por %p129, %p130
      %p132 = scmp.ne.s32.totalorder %s121, %s122
      %p133 = scmp.eq.s32.totalorder %s19, 0
      %p134 = por %p132, %p133
      %p135 = scmp.ne.s32.totalorder %s121, %s122
      %p136 = scmp.eq.s32.totalorder %s20, 1
      %p137 = por %p135, %p136
      %p139 = scmp.ne.s32.totalorder %s122, %s138
      %p140 = scmp.eq.s32.totalorder %s20, 0
      %p141 = por %p139, %p140
      %p142 = scmp.le.s32.totalorder 1, %s14
      %p143 = scmp.lt.s32.totalorder %s14, 3
      %p144 = pnand %p142, %p143
      %p145 = pneg %p144
      // Predicated region
      $region9: #{bigram_forward.1} parent=5 // pred_check
        _
      $region10: #{bigram_forward.1} parent=5 // pred_check_branch
        %147 = sbr.rel (%p144) target = $region12
      $region11: #{bigram_forward.1} parent=5 // pred_region
        %s148 = ssub.s32 %s14, 1
        // Predicated region
        $region13: #{bigram_forward.1} parent=11 // pred_check
          %p149 = pneg %p61
        $region14: #{bigram_forward.1} parent=11 // pred_check_branch
          %151 = sbr.rel (%p149) target = $region16
        $region15: #{bigram_forward.1} parent=11 // pred_region
          _
        $region16: #{bigram_forward.1} parent=11 // pred_fallthru
          _
        // Predicated region
        $region17: #{bigram_forward.1} parent=11 // pred_check
          %p152 = pneg %p82
        $region18: #{bigram_forward.1} parent=11 // pred_check_branch
          %154 = sbr.rel (%p152) target = $region20
        $region19: #{bigram_forward.1} parent=11 // pred_region
          _
        $region20: #{bigram_forward.1} parent=11 // pred_fallthru
          _
      $region12: #{bigram_forward.1} parent=5 // pred_fallthru
        _
      %p155 = scmp.lt.s32.totalorder %s14, 2
      // Predicated region
      $region21: #{bigram_forward.1} parent=5 // pred_check
        %p156 = pneg %p155
      $region22: #{bigram_forward.1} parent=5 // pred_check_branch
        %158 = sbr.rel (%p156) target = $region24
      $region23: #{bigram_forward.1} parent=5 // pred_region
        // Predicated region
        $region25: #{bigram_forward.1} parent=23 // pred_check
          %p159 = pneg %p34
        $region26: #{bigram_forward.1} parent=23 // pred_check_branch
          %161 = sbr.rel (%p159) target = $region28
        $region27: #{bigram_forward.1} parent=23 // pred_region
          %p162 = scmp.lt.s32.totalorder %s14, 1
          %s163 = scalar_select %p162, %s14, 1
          %s164 = smul.addr %s163, 8
          %s165 = scalar_lea.vmem %s0, %s164
        $region28: #{bigram_forward.1} parent=23 // pred_fallthru
          _
      $region24: #{bigram_forward.1} parent=5 // pred_fallthru
        _
      %p166 = scmp.le.s32.totalorder 1, %s14
      %p167 = scmp.lt.s32.totalorder %s14, 3
      %p168 = pnand %p166, %p167
      %p169 = pneg %p168
      // Predicated region
      $region29: #{bigram_forward.1} parent=5 // pred_check
        _
      $region30: #{bigram_forward.1} parent=5 // pred_check_branch
        %171 = sbr.rel (%p168) target = $region32
      $region31: #{bigram_forward.1} parent=5 // pred_region
        %s172 = ssub.s32 %s14, 1
        %p173 = scmp.lt.s32.totalorder %s19, 1
        %s174 = scalar_select %p173, %s19, 1
        %s175 = smul.addr %s174, 8
        %s176 = scalar_lea.vmem %s0, %s175
        %p177 = pneg %p40
        %p178 = pneg %p37
        %p179 = pneg %p61
        %p180 = pneg %p58
        %p181 = pneg %p82
        %p182 = pneg %p79
        %p183 = pneg %p108
        %p184 = pneg %p105
        %s185 = sand.u32 %s95, 1
        %s186 = scalar_lea.sflag [#allocation3], %s185
        %s187 = sand.u32 %s95, 1
        %s188 = smul.addr %s187, 8
        %s189 = scalar_lea.vmem [#allocation2], %s188
        %p190 = pneg %p134
        %p191 = pneg %p131
        %p192 = scmp.lt.s32.totalorder %s19, 1
        %s193 = scalar_select %p192, %s19, 1
        %s194 = smul.addr %s193, 8
        %s195 = scalar_lea.vmem %s4, %s194
        %p196 = scmp.lt.s32.totalorder %s19, 1
        %s197 = scalar_select %p196, %s19, 1
        %s198 = smul.addr %s197, 8
        %s199 = scalar_lea.vmem %s0, %s198
        %p200 = scmp.lt.s32.totalorder %s19, 1
        %s201 = scalar_select %p200, %s19, 1
        %s202 = smul.addr %s201, 8
        %s203 = scalar_lea.vmem %s4, %s202
        %v204 = vld [vmem:[%s199] sm:$0xff]
        %v205 = vlaneseq
        %v206 = vand.u32 %v205, 127
        %207 = vset.pattern.permute.xlu0 0
        %208 = vperm.xlu0 %207, %v204
        %v209 = vpop.permute.xlu0 %208
        %vm210 = vcmp.eq.s32.totalorder %v206, %v209
        %v211 = vsel %vm210, 1, 0
        %v212 = vcvt.s32.f32 %v211
        %v213 = vld [vmem:[%s1] sm:$0xff]
        %v214 = vld [vmem:[%s1 + $0x8] sm:$0xff]
        %v215 = vld [vmem:[%s1 + $0x10] sm:$0xff]
        %v216 = vld [vmem:[%s1 + $0x18] sm:$0xff]
        %v217 = vld [vmem:[%s1 + $0x20] sm:$0xff]
        %v218 = vld [vmem:[%s1 + $0x28] sm:$0xff]
        %v219 = vld [vmem:[%s1 + $0x30] sm:$0xff]
        %v220 = vld [vmem:[%s1 + $0x38] sm:$0xff]
        %v221 = vld [vmem:[%s1 + $0x40] sm:$0x1]
        %vm222 = vcmask 531456
        %v224 = vsel %vm222, %v212, 0
        %vm226 = vcmask 1040384
        %v228 = vsel %vm226, %v221, 0
        %230 = vmatprep.subr.mxu0 0.0
        %231 = vmatpush1.msra.mxu0 %v213
        %232 = vmatprep.subr.mxu0 0.0
        %233 = vmatpush1.msra.mxu0 %v214
        %234 = vmatprep.subr.mxu0 0.0
        %235 = vmatpush1.msra.mxu0 %v215
        %236 = vmatprep.subr.mxu0 0.0
        %237 = vmatpush1.msra.mxu0 %v216
        %238 = vmatprep.subr.mxu0 0.0
        %239 = vmatpush1.msra.mxu0 %v217
        %240 = vmatprep.subr.mxu0 0.0
        %241 = vmatpush1.msra.mxu0 %v218
        %242 = vmatprep.subr.mxu0 0.0
        %243 = vmatpush1.msra.mxu0 %v219
        %244 = vmatprep.subr.mxu0 0.0
        %245 = vmatpush1.msra.mxu0 %v220
        %246 = vmatprep.subr.mxu0 0.0
        %247 = vmatpush1.msra.mxu0 %v228
        %248 = vmatprep.subr.mxu0 0.0
        %249 = vmatpush1.msra.mxu0 0.0
        %250 = vmatprep.subr.mxu0 0.0
        %251 = vmatpush1.msra.mxu0 0.0
        %252 = vmatprep.subr.mxu0 0.0
        %253 = vmatpush1.msra.mxu0 0.0
        %254 = vmatprep.subr.mxu0 0.0
        %255 = vmatpush1.msra.mxu0 0.0
        %256 = vmatprep.subr.mxu0 0.0
        %257 = vmatpush1.msra.mxu0 0.0
        %258 = vmatprep.subr.mxu0 0.0
        %259 = vmatpush1.msra.mxu0 0.0
        %260 = vmatprep.subr.mxu0 0.0
        %261 = vmatpush1.msra.mxu0 0.0
        %262 = vmatprep.subr.mxu0 0.0
        %263 = vmatpush1.msra.mxu0 0.0
        %264 = vmatprep.subr.mxu0 0.0
        %265 = vmatpush1.msra.mxu0 0.0
        %266 = vmatprep.subr.mxu0 0.0
        %267 = vmatpush1.msra.mxu0 0.0
        %268 = vmatprep.subr.mxu0 0.0
        %269 = vmatpush1.msra.mxu0 0.0
        %270 = vmatprep.subr.mxu0 0.0
        %271 = vmatpush1.msra.mxu0 0.0
        %272 = vmatprep.subr.mxu0 0.0
        %273 = vmatpush1.msra.mxu0 0.0
        %274 = vmatprep.subr.mxu0 0.0
        %275 = vmatpush1.msra.mxu0 0.0
        %276 = vmatprep.subr.mxu0 0.0
        %277 = vmatpush1.msra.mxu0 0.0
        %278 = vmatprep.subr.mxu0 0.0
        %279 = vmatpush1.msra.mxu0 0.0
        %280 = vmatprep.subr.mxu0 0.0
        %281 = vmatpush1.msra.mxu0 0.0
        %282 = vmatprep.subr.mxu0 0.0
        %283 = vmatpush1.msra.mxu0 0.0
        %284 = vmatprep.subr.mxu0 0.0
        %285 = vmatpush1.msra.mxu0 0.0
        %286 = vmatprep.subr.mxu0 0.0
        %287 = vmatpush1.msra.mxu0 0.0
        %288 = vmatprep.subr.mxu0 0.0
        %289 = vmatpush1.msra.mxu0 0.0
        %290 = vmatprep.subr.mxu0 0.0
        %291 = vmatpush1.msra.mxu0 0.0
        %292 = vmatprep.subr.mxu0 0.0
        %293 = vmatpush1.msra.mxu0 0.0
        %294 = vmatprep.mubr.f32.mxu0 0.0
        %295 = vmatmul.mubr.f32.gmra.mrb[0].mxu0 %v224
        %v296 = vpop.f32.mrb[0].mxu0
        %v297 = vadd.f32 0.0, %v296
        %v298 = vpop.f32.mrb[0].mxu0
        %299 = vdwg.mxu0
        %300 = vst.msk [vmem:[%s189] sm:$0xff] %vm222, %v297
        %v301 = vld [vmem:[%s2] sm:$0x1]
        %v303 = vlaneseq
        %v304 = vshrl.u32 %v303, 7
        %v305 = vsub.s32 0, %v304
        %v306 = vrot.slane %v301, %v305
        %v308 = vsel %vm210, %v306, 0.0
        %309 = vset.pattern.permute.xlu0 1
        %310 = vperm.xlu0 %309, %v204
        %v311 = vpop.permute.xlu0 %310
        %vm312 = vcmp.eq.s32.totalorder %v206, %v311
        %v313 = vsel %vm312, %v297, 0.0
        %v314 = vsub.f32 %v308, %v313
        %v315 = vsel %vm222, %v314, 0.0
        %316 = vadd.xlane.f32.xlu0 %v315
        %v317 = vpop.xlane.xlu0 %316
        %vm318 = vcmask 7168
        %319 = vst.msk [vmem:[%s203] sm:$0xff] %vm318, %v317
        %s320 = sand.u32 %s95, 1
        %s321 = scalar_lea.sflag [#allocation3], %s320
        %s322 = sand.u32 %s95, 1
        %s323 = smul.addr %s322, 8
        %s324 = scalar_lea.vmem [#allocation2], %s323
        %p325 = scmp.lt.s32.totalorder %s19, 1
        %s326 = scalar_select %p325, %s19, 1
        %s327 = smul.addr %s326, 8
        %s328 = scalar_lea.vmem %s4, %s327
        // Predicated region
        $region33: #{bigram_forward.1} parent=31 // pred_check
          %p329 = pneg %p105
        $region34: #{bigram_forward.1} parent=31 // pred_check_branch
          %331 = sbr.rel (%p329) target = $region36
        $region35: #{bigram_forward.1} parent=31 // pred_region
          %s333 = ssub.s32 128, 128
          %334 = vsyncadd %s321, %s333
          %s335 = smul.addr %s19, 128
          %s336 = scalar_lea.hbm %s3, %s335
          %s338 = sshll.u32 %s324, 4
          %s339 = int_to_ptr.vmem [resolvable:$true] %s338
          %341 = dma.vmem_to_hbm [thread:$0]  %s339, 128, %s336, %s321
        $region36: #{bigram_forward.1} parent=31 // pred_fallthru
          _
        // Predicated region
        $region37: #{bigram_forward.1} parent=31 // pred_check
          %p342 = pneg %p131
        $region38: #{bigram_forward.1} parent=31 // pred_check_branch
          %344 = sbr.rel (%p342) target = $region40
        $region39: #{bigram_forward.1} parent=31 // pred_region
          _
        $region40: #{bigram_forward.1} parent=31 // pred_fallthru
          _
      $region32: #{bigram_forward.1} parent=5 // pred_fallthru
        _
      %p345 = scmp.le.s32.totalorder 2, %s14
      // Predicated region
      $region41: #{bigram_forward.1} parent=5 // pred_check
        %p346 = pneg %p345
      $region42: #{bigram_forward.1} parent=5 // pred_check_branch
        %348 = sbr.rel (%p346) target = $region44
      $region43: #{bigram_forward.1} parent=5 // pred_region
        %s349 = ssub.s32 %s14, 2
        // Predicated region
        $region45: #{bigram_forward.1} parent=43 // pred_check
          %p350 = pneg %p111
        $region46: #{bigram_forward.1} parent=43 // pred_check_branch
          %352 = sbr.rel (%p350) target = $region48
        $region47: #{bigram_forward.1} parent=43 // pred_region
          %s353 = sand.u32 %s96, 1
          %s354 = scalar_lea.sflag [#allocation3], %s353
          %s355 = sand.u32 %s96, 1
          %s356 = smul.addr %s355, 8
          %s357 = scalar_lea.vmem [#allocation2], %s356
          %358 = dma.done %s354, 128
        $region48: #{bigram_forward.1} parent=43 // pred_fallthru
          _
        // Predicated region
        $region49: #{bigram_forward.1} parent=43 // pred_check
          %p359 = pneg %p137
        $region50: #{bigram_forward.1} parent=43 // pred_check_branch
          %361 = sbr.rel (%p359) target = $region52
        $region51: #{bigram_forward.1} parent=43 // pred_region
          %p362 = scmp.lt.s32.totalorder %s20, 1
          %s363 = scalar_select %p362, %s20, 1
          %s364 = smul.addr %s363, 8
          %s365 = scalar_lea.vmem %s4, %s364
        $region52: #{bigram_forward.1} parent=43 // pred_fallthru
          _
      $region44: #{bigram_forward.1} parent=5 // pred_fallthru
        _
    $region6: #{bigram_forward.1} parent=1 // loop_footer
      %s18 = sadd.s32 1, %s14
    $region7: #{bigram_forward.1} parent=1 // loop_footer_branch
      %13 = sbr.rel target = $region3
    $region8: #{bigram_forward.1} parent=1 // loop_exit
      _
    %366 = vsyncpa [#allocation3], 1
    %s367 = scalar_lea.sflag [#allocation3], 1
    %368 = vsyncpa %s367, 1

</llo_original>
